<compile_context>
chip_gen: v6e
topology: v6e:2x2x1
jax: 0.10.0
libtpu: 0.0.40
codegen_flags: <defaults>
</compile_context>

<pallas_src>
import functools

import jax
import jax.numpy as jnp
from jax import lax
from jax.experimental import pallas as pl
from jax.experimental.pallas import tpu as pltpu

NUM_CLASSES = 10


def _round_up(x, m):
    return (x + m - 1) // m * m


def he_loss2_kernel(cm_ref, cos_ref, lbl_ref, out_ref, acc_ref,
                    *, s, n_total, needs_mask):
    """One (C, TILE_N) batch tile of additive-margin cross-entropy.

    cm_ref : (1,)  f32  scalar-prefetch (SMEM) -- the margin `cm`
    cos_ref: (C, TILE_N) input dtype, VMEM     -- cosine scores, batch on lanes
    lbl_ref: (1, TILE_N) int32, VMEM           -- labels row
    out_ref: (1, 8, 128) f32, VMEM             -- per-shard partial sum (broadcast)
    acc_ref: (1, 1) f32, SMEM scratch          -- running sum for this shard
    """
    shard = pl.program_id(0)
    step = pl.program_id(1)
    steps = pl.num_programs(1)

    @pl.when(step == 0)
    def _():
        acc_ref[0, 0] = jnp.float32(0.0)

    cos = cos_ref[...].astype(jnp.float32)            # (C, TILE_N)
    lbl = lbl_ref[...]                                # (1, TILE_N) int32
    s_f = jnp.float32(s)
    cm_s = cm_ref[0] * s_f                            # margin pre-scaled by s

    n_cls, tile_n = cos.shape
    cls_idx = lax.broadcasted_iota(jnp.int32, (n_cls, tile_n), 0)
    # NOTE: labels are assumed to be in [0, NUM_CLASSES); out-of-range labels
    # would silently give picked == 0 (matches "garbage in" behaviour).
    onehot = cls_idx == lbl                           # broadcast (1,T) vs (C,T)

    # logits = (cos - onehot*cm) * s  ==  cos*s - onehot*(cm*s)
    logits = cos * s_f - jnp.where(onehot, cm_s, jnp.float32(0.0))

    # per-column cross entropy: logsumexp(logits) - logits[label]
    m = jnp.max(logits, axis=0, keepdims=True)                              # (1,T)
    lse = m + jnp.log(jnp.sum(jnp.exp(logits - m), axis=0, keepdims=True))  # (1,T)
    picked = jnp.sum(jnp.where(onehot, logits, jnp.float32(0.0)),
                     axis=0, keepdims=True)                                 # (1,T)
    per_example = lse - picked                                              # (1,T)

    if needs_mask:
        # mask out batch-padding columns (tail of the padded batch)
        base = (shard * steps + step) * tile_n
        col = lax.broadcasted_iota(jnp.int32, (1, tile_n), 1)
        valid = (base + col) < n_total
        per_example = jnp.where(valid, per_example, jnp.float32(0.0))

    acc_ref[0, 0] += jnp.sum(per_example)

    @pl.when(step == steps - 1)
    def _():
        # lane-dense, unmasked store of the shard's partial sum
        out_ref[...] = jnp.broadcast_to(acc_ref[0, 0], out_ref.shape)


def he_loss2(cosin_theta, labels, cm=0.0, *, s=30.0, tile_n=8192, max_shards=2):
    """Pallas equivalent of HELoss2(s).forward(cosin_theta, labels, cm)."""
    n, c = cosin_theta.shape
    assert c == NUM_CLASSES

    # Lane-dense layout: (C, N) with the batch on the lane axis.
    # TODO(synk): ideally the upstream layer emits (C, N) directly so this
    # wrapper transpose (one extra HBM pass over a small array) disappears.
    cos_t = cosin_theta.T                                   # keep native dtype
    lbl_row = labels.astype(jnp.int32).reshape(1, n)

    tile = min(tile_n, _round_up(n, 128))
    n_blocks = pl.cdiv(n, tile)
    shards = max_shards if n_blocks >= max_shards else 1    # 2 TCs on v7x
    blocks_per_shard = pl.cdiv(n_blocks, shards)
    n_pad = shards * blocks_per_shard * tile

    if n_pad != n:
        cos_t = jnp.pad(cos_t, ((0, 0), (0, n_pad - n)))
        lbl_row = jnp.pad(lbl_row, ((0, 0), (0, n_pad - n)))

    cm_arr = jnp.asarray(cm, jnp.float32).reshape(1)

    in_bytes = n * NUM_CLASSES * jnp.dtype(cosin_theta.dtype).itemsize + n * 4
    cost = pl.CostEstimate(
        flops=6 * n * NUM_CLASSES,
        transcendentals=n * (NUM_CLASSES + 1),
        bytes_accessed=in_bytes,
    )

    grid_spec = pltpu.PrefetchScalarGridSpec(
        num_scalar_prefetch=1,                              # cm lands in SMEM
        grid=(shards, blocks_per_shard),
        in_specs=[
            pl.BlockSpec((NUM_CLASSES, tile),
                         lambda sh, st, cm_r: (0, sh * blocks_per_shard + st)),
            pl.BlockSpec((1, tile),
                         lambda sh, st, cm_r: (0, sh * blocks_per_shard + st)),
        ],
        out_specs=pl.BlockSpec((1, 8, 128), lambda sh, st, cm_r: (sh, 0, 0)),
        scratch_shapes=[pltpu.SMEM((1, 1), jnp.float32)],
    )

    partials = pl.pallas_call(
        functools.partial(he_loss2_kernel, s=float(s), n_total=n,
                          needs_mask=(n_pad != n)),
        out_shape=jax.ShapeDtypeStruct((shards, 8, 128), jnp.float32),
        grid_spec=grid_spec,
        compiler_params=pltpu.CompilerParams(
            dimension_semantics=("parallel", "arbitrary"),
            vmem_limit_bytes=32 * 1024 * 1024,
        ),
        cost_estimate=cost,
    )(cm_arr, cos_t, lbl_row)

    # combine per-shard partial sums and divide by the *true* batch size
    return jnp.sum(partials[:, 0, 0]) / jnp.float32(n)


def he_loss2_ref(cosin_theta, labels, cm=0.0, *, s=30.0):
    # Pure-JAX reference mirroring the PyTorch module.
    m = jax.nn.one_hot(labels, NUM_CLASSES, dtype=jnp.float32) * cm
    logits = (cosin_theta.astype(jnp.float32) - m) * s
    logp = jax.nn.log_softmax(logits, axis=-1)
    return -jnp.mean(jnp.take_along_axis(logp, labels[:, None], axis=-1))


if __name__ == "__main__":
    key = jax.random.PRNGKey(0)
    k1, k2, k3, k4 = jax.random.split(key, 4)

    s = 30.0
    cm = 0.35

    # Small case (N=8): single tile, single shard, exactly-tiled after rounding.
    n1 = 8
    cos1 = jax.random.uniform(k1, (n1, NUM_CLASSES), minval=-1.0, maxval=1.0,
                              dtype=jnp.float32)
    lbl1 = jax.random.randint(k2, (n1,), 0, NUM_CLASSES, dtype=jnp.int32)
    loss1 = jax.block_until_ready(he_loss2(cos1, lbl1, cm, s=s))
    ref1 = he_loss2_ref(cos1, lbl1, cm, s=s)
    assert jnp.allclose(loss1, ref1, rtol=1e-5, atol=1e-5), (loss1, ref1)

    # Larger case exercising the grid, tail masking and the 2-shard
    # (megacore) partial-sum path with a small tile.
    n2 = 300
    cos2 = jax.random.uniform(k3, (n2, NUM_CLASSES), minval=-1.0, maxval=1.0,
                              dtype=jnp.float32)
    lbl2 = jax.random.randint(k4, (n2,), 0, NUM_CLASSES, dtype=jnp.int32)
    loss2 = jax.block_until_ready(he_loss2(cos2, lbl2, cm, s=s, tile_n=128))
    ref2 = he_loss2_ref(cos2, lbl2, cm, s=s)
    assert jnp.allclose(loss2, ref2, rtol=1e-5, atol=1e-5), (loss2, ref2)

    # bf16 input path (native dtype kept through HBM, cast in-kernel).
    cos3 = cos2.astype(jnp.bfloat16)
    loss3 = jax.block_until_ready(he_loss2(cos3, lbl2, cm, s=s))
    ref3 = he_loss2_ref(cos3, lbl2, cm, s=s)
    assert jnp.allclose(loss3, ref3, rtol=2e-2, atol=2e-2), (loss3, ref3)

    print("KERNEL_OK")
</pallas_src>

<mosaic_0001>
module attributes {stable_mosaic.version = 11 : i64} {
  func.func @he_loss2_kernel(%arg0: i32, %arg1: i32, %arg2: memref<1xf32, #tpu.memory_space<smem>>, %arg3: memref<10x128xf32, #tpu.memory_space<vmem>>, %arg4: memref<1x128xi32, #tpu.memory_space<vmem>>, %arg5: memref<1x8x128xf32, #tpu.memory_space<vmem>>, %arg6: memref<1x1xf32, #tpu.memory_space<smem>>) attributes {dimension_semantics = [#tpu.dimension_semantics<parallel>, #tpu.dimension_semantics<arbitrary>], iteration_bounds = array<i64: 1, 1>, scalar_prefetch = 1 : i64, scratch_operands = 1 : i64, tpu.core_type = #tpu.core_type<tc>, window_params = [{transform_indices = @transform_0, window_bounds = array<i64: 10, 128>}, {transform_indices = @transform_1, window_bounds = array<i64: 1, 128>}, {transform_indices = @transform_2, window_bounds = array<i64: 1, 8, 128>}]} {
    %c0_i32 = arith.constant 0 : i32
    %0 = arith.cmpi eq, %arg1, %c0_i32 : i32
    %1 = arith.extui %0 : i1 to i32
    %c0_i32_0 = arith.constant 0 : i32
    %2 = arith.cmpi ne, %1, %c0_i32_0 : i32
    scf.if %2 {
      %cst_19 = arith.constant 0.000000e+00 : f32
      %c0_20 = arith.constant 0 : index
      %c0_21 = arith.constant 0 : index
      %50 = memref.load %arg6[%c0_20, %c0_21] : memref<1x1xf32, #tpu.memory_space<smem>>
      memref.store %cst_19, %arg6[%c0_20, %c0_21] : memref<1x1xf32, #tpu.memory_space<smem>>
    } else {
    }
    %c0 = arith.constant 0 : index
    %c0_1 = arith.constant 0 : index
    %3 = vector.load %arg3[%c0, %c0_1] : memref<10x128xf32, #tpu.memory_space<vmem>>, vector<10x128xf32>
    %c0_2 = arith.constant 0 : index
    %c0_3 = arith.constant 0 : index
    %4 = vector.load %arg4[%c0_2, %c0_3] : memref<1x128xi32, #tpu.memory_space<vmem>>, vector<1x128xi32>
    %c0_4 = arith.constant 0 : index
    %5 = memref.load %arg2[%c0_4] : memref<1xf32, #tpu.memory_space<smem>>
    %cst = arith.constant 3.000000e+01 : f32
    %6 = arith.mulf %5, %cst : f32
    %7 = tpu.iota {dimensions = array<i32: 0>} : vector<10x128xi32>
    %8 = vector.broadcast %4 : vector<1x128xi32> to vector<10x128xi32>
    %9 = arith.cmpi eq, %7, %8 : vector<10x128xi32>
    %cst_5 = arith.constant 3.000000e+01 : f32
    %10 = vector.broadcast %cst_5 : f32 to vector<10x128xf32>
    %11 = arith.mulf %3, %10 : vector<10x128xf32>
    %cst_6 = arith.constant 0.000000e+00 : f32
    %12 = vector.broadcast %6 : f32 to vector<10x128xf32>
    %13 = vector.broadcast %cst_6 : f32 to vector<10x128xf32>
    %14 = arith.select %9, %12, %13 : vector<10x128xi1>, vector<10x128xf32>
    %15 = arith.subf %11, %14 : vector<10x128xf32>
    %cst_7 = arith.constant dense<0xFF800000> : vector<128xf32>
    %16 = vector.multi_reduction <maximumf>, %15, %cst_7 [0] : vector<10x128xf32> to vector<128xf32>
    %17 = vector.shape_cast %16 : vector<128xf32> to vector<1x128xf32>
    %18 = vector.broadcast %17 : vector<1x128xf32> to vector<10x128xf32>
    %19 = arith.subf %15, %18 : vector<10x128xf32>
    %20 = math.exp %19 : vector<10x128xf32>
    %cst_8 = arith.constant dense<0.000000e+00> : vector<128xf32>
    %21 = vector.multi_reduction <add>, %20, %cst_8 [0] : vector<10x128xf32> to vector<128xf32>
    %22 = vector.shape_cast %21 : vector<128xf32> to vector<1x128xf32>
    %23 = math.log %22 : vector<1x128xf32>
    %24 = arith.addf %17, %23 : vector<1x128xf32>
    %cst_9 = arith.constant 0.000000e+00 : f32
    %25 = vector.broadcast %cst_9 : f32 to vector<10x128xf32>
    %26 = arith.select %9, %15, %25 : vector<10x128xi1>, vector<10x128xf32>
    %cst_10 = arith.constant dense<0.000000e+00> : vector<128xf32>
    %27 = vector.multi_reduction <add>, %26, %cst_10 [0] : vector<10x128xf32> to vector<128xf32>
    %28 = vector.shape_cast %27 : vector<128xf32> to vector<1x128xf32>
    %29 = arith.subf %24, %28 : vector<1x128xf32>
    %c1_i32 = arith.constant 1 : i32
    %30 = arith.muli %arg0, %c1_i32 : i32
    %31 = arith.addi %30, %arg1 : i32
    %c128_i32 = arith.constant 128 : i32
    %32 = arith.muli %31, %c128_i32 : i32
    %33 = tpu.iota {dimensions = array<i32: 1>} : vector<1x128xi32>
    %34 = vector.broadcast %32 : i32 to vector<1x128xi32>
    %35 = arith.addi %34, %33 : vector<1x128xi32>
    %c8_i32 = arith.constant 8 : i32
    %36 = vector.broadcast %c8_i32 : i32 to vector<1x128xi32>
    %37 = arith.cmpi slt, %35, %36 : vector<1x128xi32>
    %cst_11 = arith.constant 0.000000e+00 : f32
    %38 = vector.broadcast %cst_11 : f32 to vector<1x128xf32>
    %39 = arith.select %37, %29, %38 : vector<1x128xi1>, vector<1x128xf32>
    %c0_12 = arith.constant 0 : index
    %c0_13 = arith.constant 0 : index
    %40 = memref.load %arg6[%c0_12, %c0_13] : memref<1x1xf32, #tpu.memory_space<smem>>
    %41 = vector.shape_cast %39 : vector<1x128xf32> to vector<1x1x128xf32>
    %cst_14 = arith.constant dense<0.000000e+00> : vector<1xf32>
    %42 = vector.multi_reduction <add>, %41, %cst_14 [1, 2] : vector<1x1x128xf32> to vector<1xf32>
    %43 = vector.shape_cast %42 : vector<1xf32> to vector<1x1x1xf32>
    %44 = vector.extract %43[0, 0, 0] : f32 from vector<1x1x1xf32>
    %45 = arith.addf %40, %44 : f32
    %c0_15 = arith.constant 0 : index
    %c0_16 = arith.constant 0 : index
    %46 = memref.load %arg6[%c0_15, %c0_16] : memref<1x1xf32, #tpu.memory_space<smem>>
    memref.store %45, %arg6[%c0_15, %c0_16] : memref<1x1xf32, #tpu.memory_space<smem>>
    %c0_i32_17 = arith.constant 0 : i32
    %47 = arith.cmpi eq, %arg1, %c0_i32_17 : i32
    %48 = arith.extui %47 : i1 to i32
    %c0_i32_18 = arith.constant 0 : i32
    %49 = arith.cmpi ne, %48, %c0_i32_18 : i32
    scf.if %49 {
      %c0_19 = arith.constant 0 : index
      %c0_20 = arith.constant 0 : index
      %50 = memref.load %arg6[%c0_19, %c0_20] : memref<1x1xf32, #tpu.memory_space<smem>>
      %51 = vector.broadcast %50 : f32 to vector<1x8x128xf32>
      %c0_21 = arith.constant 0 : index
      %c0_22 = arith.constant 0 : index
      %c0_23 = arith.constant 0 : index
      %52 = vector.load %arg5[%c0_21, %c0_22, %c0_23] : memref<1x8x128xf32, #tpu.memory_space<vmem>>, vector<1x8x128xf32>
      tpu.vector_store %arg5[%c0_21, %c0_22, %c0_23], %51 {strides = array<i32>} : memref<1x8x128xf32, #tpu.memory_space<vmem>>, vector<1x8x128xf32>,
    } else {
    }
    return
  }
  func.func @transform_0(%arg0: i32, %arg1: i32, %arg2: memref<1xf32, #tpu.memory_space<smem>>) -> (i32, i32) {
    %c1_i32 = arith.constant 1 : i32
    %0 = arith.muli %arg0, %c1_i32 : i32
    %1 = arith.addi %0, %arg1 : i32
    %c0_i32 = arith.constant 0 : i32
    %c0_i32_0 = arith.constant 0 : i32
    return %c0_i32, %1 : i32, i32
  }
  func.func @transform_1(%arg0: i32, %arg1: i32, %arg2: memref<1xf32, #tpu.memory_space<smem>>) -> (i32, i32) {
    %c1_i32 = arith.constant 1 : i32
    %0 = arith.muli %arg0, %c1_i32 : i32
    %1 = arith.addi %0, %arg1 : i32
    %c0_i32 = arith.constant 0 : i32
    %c0_i32_0 = arith.constant 0 : i32
    return %c0_i32, %1 : i32, i32
  }
  func.func @transform_2(%arg0: i32, %arg1: i32, %arg2: memref<1xf32, #tpu.memory_space<smem>>) -> (i32, i32, i32) {
    %c0_i32 = arith.constant 0 : i32
    %c0_i32_0 = arith.constant 0 : i32
    %c0_i32_1 = arith.constant 0 : i32
    return %arg0, %c0_i32, %c0_i32_0 : i32, i32, i32
  }
}

</mosaic_0001>

<llo_original>
// kernel: tpu_custom_call.1
$region0: #{tpu_custom_call.1}
  #allocation0 [shape = 'u32[]', space=smem, size = 0x4, offset = 0x4, fixed_abs, tag = 'smem constant byte address 0x4 - core index']
  #allocation1 [shape = 'u32[144,128]{1,0:T(1,128)}', space=vmem, size = 0x12000, scoped, tag = 'internal scratch']
  #allocation2 [shape = 'f32[1,1]{1,0:T(1,128)}', space=smem, size = 0x200, scoped, tag = 'scratch operand']
  #allocation3 [shape = 's32[1]{0}', space=sflag, size = 0x4, scoped, tag = 'scoped memory for tpu_custom_call.1']
  #allocation4 [shape = 'f32[1]{0:T(128)S(6)}', space=smem, size = 0x200, scoped, tag = 'prefetched SMEM operand 0']
  %s0 = inlined_call_operand.<no memory space> [shape: f32[1], index: 0, kind: input, shape index: {}]
  %s1 = inlined_call_operand.hbm [shape: f32[10,128], index: 1, kind: input, shape index: {}]
  %s2 = inlined_call_operand.vmem [shape: s32[1,128], index: 2, kind: input, shape index: {}]
  %s3 = inlined_call_operand.hbm [shape: f32[1,8,128], index: 3, kind: output, shape index: {}]
  %s4 = sld [smem:[#allocation0]]
  $region30: #{tpu_custom_call.1} parent=0
    _
  %s6 = ssub.s32 1, %s4
  %s7 = scalar_select 0, %s6, %s4
  %8 = sst [smem:[#allocation4]] %s0
  $region1: #{tpu_custom_call.1} parent=0
    #allocation5 [shape = 'u8[8192]{0}', space=vmem, size = 0x2000, scoped, tag = 'input window, operand 1, single buffered']
    #allocation6 [shape = 's32[1]{0}', space=sflag, size = 0x4, scoped, tag = 'scoped memory for tpu_custom_call.1']
    #allocation7 [shape = 's32[1]{0}', space=sflag, size = 0x4, scoped, tag = 'scoped memory for tpu_custom_call.1']
    #allocation8 [shape = 'u8[4096]{0}', space=vmem, size = 0x1000, scoped, tag = 'output window, operand 0, single buffered']
    %9 = vsyncpa [#allocation6], 0
    %10 = vsyncpa [#allocation7], 0
    // Predicated region
    $region2: #{tpu_custom_call.1} parent=1 // pred_check
      _
    $region3: #{tpu_custom_call.1} parent=1 // pred_check_branch
      %12 = sbr.rel (0) target = $region5
    $region4: #{tpu_custom_call.1} parent=1 // pred_region
      %s13 = sadd.s32 0, 0
      %s15 = ssub.s32 256, 256
      %16 = vsyncadd [#allocation6], %s15
      %s17 = smul.addr %s13, 128
      %s18 = scalar_lea.hbm %s1, %s17
      %s19 = sshll.u32 [#allocation5], 4
      %s20 = int_to_ptr.vmem [resolvable:$true] %s19
      %25 = dma.hbm_to_vmem [thread:$0]  %s18, 256, %s20, [#allocation6], 128, 128, 8
    $region5: #{tpu_custom_call.1} parent=1 // pred_fallthru
      _
    // Predicated region
    $region6: #{tpu_custom_call.1} parent=1 // pred_check
      _
    $region7: #{tpu_custom_call.1} parent=1 // pred_check_branch
      %27 = sbr.rel (0) target = $region9
    $region8: #{tpu_custom_call.1} parent=1 // pred_region
      %s28 = sadd.s32 0, 0
      %p29 = scmp.lt.s32.totalorder %s28, 0
      %s30 = scalar_select %p29, %s28, 0
      %s31 = scalar_lea.vmem %s2, %s30
      %s32 = sadd.s32 0, 0
    $region9: #{tpu_custom_call.1} parent=1 // pred_fallthru
      _
    // Predicated region
    $region10: #{tpu_custom_call.1} parent=1 // pred_check
      _
    $region11: #{tpu_custom_call.1} parent=1 // pred_check_branch
      %34 = sbr.rel (0) target = $region13
    $region12: #{tpu_custom_call.1} parent=1 // pred_region
      %35 = dma.done [#allocation6], 256
    $region13: #{tpu_custom_call.1} parent=1 // pred_fallthru
      _
    %s36 = sadd.s32 0, 0
    %p37 = scmp.lt.s32.totalorder %s36, 0
    %s38 = scalar_select %p37, %s36, 0
    %s39 = scalar_lea.vmem %s2, %s38
    %s40 = sadd.s32 0, 0
    %s41 = sadd.s32 0, 0
    %p42 = scmp.lt.s32.totalorder %s41, 0
    %s43 = scalar_select %p42, %s41, 0
    %s44 = scalar_lea.vmem %s2, %s43
    %s45 = sadd.s32 0, 0
    %p46 = scmp.eq.s32.totalorder 0, 0
    // Predicated region
    $region14: #{tpu_custom_call.1} parent=1 // pred_check
      %p47 = pneg %p46
    $region15: #{tpu_custom_call.1} parent=1 // pred_check_branch
      %49 = sbr.rel (%p47) target = $region17
    $region16: #{tpu_custom_call.1} parent=1 // pred_region
      %s50 = scalar_lea.smem [#allocation2], 0
      %51 = sst [smem:[%s50]] 0.0
    $region17: #{tpu_custom_call.1} parent=1 // pred_fallthru
      _
    %v52 = vld [vmem:[#allocation5] sm:$0xff]
    %v53 = vld [vmem:[#allocation5 + $0x8] sm:$0x3]
    %v54 = vld [vmem:[%s44] sm:$0x1]
    %s55 = sld [smem:[#allocation4]]
    %s56 = smul.f32 %s55, 30.0
    %v57 = vlaneseq
    %v58 = vshrl.u32 %v57, 7
    %v59 = vadd.s32 %v58, 8
    %v60 = vlaneseq
    %v61 = vshrl.u32 %v60, 7
    %v62 = vsub.s32 0, %v61
    %v63 = vrot.slane %v54, %v62
    %vm64 = vcmp.eq.s32.totalorder %v58, %v63
    %vm65 = vcmp.eq.s32.totalorder %v59, %v63
    %v66 = vmul.f32 %v52, 30.0
    %v67 = vmul.f32 %v53, 30.0
    %v68 = vstv %s56
    %v69 = vsel %vm64, %v68, 0.0
    %v70 = vsel %vm65, %v68, 0.0
    %v71 = vsub.f32 %v66, %v69
    %v72 = vsub.f32 %v67, %v70
    %vm73 = vcmask 1041408
    %v74 = vsel %vm73, %v72, -inf
    %v75 = vmax.f32 %v71, %v74
    %v76 = vrot.slane %v75, 4
    %v77 = vmax.f32 %v75, %v76
    %v78 = vrot.slane %v77, 2
    %v79 = vmax.f32 %v77, %v78
    %v80 = vrot.slane %v79, 1
    %v81 = vmax.f32 %v79, %v80
    %v82 = vsub.f32 %v71, %v81
    %v83 = vsub.f32 %v72, %v81
    %v84 = vmul.f32 %v82, 1.442695
    %v85 = vpow.pop %v84
    %v86 = vmul.f32 %v83, 1.442695
    %v87 = vpow.pop %v86
    %v88 = vsel %vm73, %v87, 0.0
    %v89 = vadd.f32 %v85, %v88
    %v90 = vrot.slane %v89, 4
    %v91 = vadd.f32 %v89, %v90
    %v92 = vrot.slane %v91, 2
    %v93 = vadd.f32 %v91, %v92
    %v94 = vrot.slane %v93, 1
    %v95 = vadd.f32 %v93, %v94
    %v96 = vlog2.pop %v95
    %v97 = vmul.f32 %v96, 0.6931472
    %v98 = vadd.f32 %v81, %v97
    %v99 = vsel %vm64, %v71, 0.0
    %v100 = vsel %vm65, %v72, 0.0
    %v101 = vsel %vm73, %v100, 0.0
    %v102 = vadd.f32 %v99, %v101
    %v103 = vrot.slane %v102, 4
    %v104 = vadd.f32 %v102, %v103
    %v105 = vrot.slane %v104, 2
    %v106 = vadd.f32 %v104, %v105
    %v107 = vrot.slane %v106, 1
    %v108 = vadd.f32 %v106, %v107
    %v109 = vsub.f32 %v98, %v108
    %s110 = sadd.s32 0, 0
    %s111 = smul.u32 %s110, 128
    %v112 = vlaneseq
    %v113 = vand.u32 %v112, 127
    %v114 = vstv %s111
    %v115 = vadd.s32 %v114, %v113
    %vm116 = vcmp.lt.s32.totalorder %v115, 8
    %v117 = vsel %vm116, %v109, 0.0
    %s118 = sld [smem:[#allocation2]]
    %vm119 = vcmask 1040384
    %v120 = vsel %vm119, %v117, 0.0
    %121 = vadd.xlane.f32.xlu0 %v120
    %v122 = vpop.xlane.xlu0 %121
    %v123 = vrot.slane %v122, 4
    %v124 = vadd.f32 %v122, %v123
    %v125 = vrot.slane %v124, 2
    %v126 = vadd.f32 %v124, %v125
    %v127 = vrot.slane %v126, 1
    %v128 = vadd.f32 %v126, %v127
    %s129 = vtos %v128
    %s130 = sadd.f32 %s118, %s129
    %s131 = scalar_lea.smem [#allocation2], 0
    %132 = sst [smem:[%s131]] %s130
    // Predicated region
    $region18: #{tpu_custom_call.1} parent=1 // pred_check
      %p133 = pneg %p46
    $region19: #{tpu_custom_call.1} parent=1 // pred_check_branch
      %135 = sbr.rel (%p133) target = $region21
    $region20: #{tpu_custom_call.1} parent=1 // pred_region
      %s136 = sld [smem:[#allocation2]]
      %v137 = vstv %s136
      %138 = vst [vmem:[#allocation8] sm:$0xff] %v137
    $region21: #{tpu_custom_call.1} parent=1 // pred_fallthru
      _
    // Predicated region
    $region22: #{tpu_custom_call.1} parent=1 // pred_check
      _
    $region23: #{tpu_custom_call.1} parent=1 // pred_check_branch
      %140 = sbr.rel (0) target = $region25
    $region24: #{tpu_custom_call.1} parent=1 // pred_region
      %s142 = ssub.s32 128, 128
      %143 = vsyncadd [#allocation7], %s142
      %s145 = sshll.u32 [#allocation8], 4
      %s146 = int_to_ptr.vmem [resolvable:$true] %s145
      %148 = dma.vmem_to_hbm [thread:$0]  %s146, 128, %s3, [#allocation7]
    $region25: #{tpu_custom_call.1} parent=1 // pred_fallthru
      _
    // Predicated region
    $region26: #{tpu_custom_call.1} parent=1 // pred_check
      _
    $region27: #{tpu_custom_call.1} parent=1 // pred_check_branch
      %150 = sbr.rel (0) target = $region29
    $region28: #{tpu_custom_call.1} parent=1 // pred_region
      %151 = dma.done [#allocation7], 128
    $region29: #{tpu_custom_call.1} parent=1 // pred_fallthru
      _
    %152 = vsyncpa [#allocation6], 1
    %153 = vsyncpa [#allocation7], 1

</llo_original>
